<compile_context>
chip_gen: v7x
topology: tpu7x:2x2x1
jax: 0.10.0
libtpu: 0.0.40
codegen_flags: <defaults>
</compile_context>

<pallas_src>
import functools

import jax
import jax.numpy as jnp
from jax.experimental import pallas as pl
from jax.experimental.pallas import tpu as pltpu

BN_EPS = 1e-5
LANE = 128


def _round_up(x, m):
    return ((x + m - 1) // m) * m


def _make_fused_mlp_kernel(layer_n, head):
    """Builds kernel(x, [w_i, (gamma_i, beta_i) | b_i]*layer_n, out)."""

    def kernel(*refs):
        x_ref = refs[0]
        o_ref = refs[-1]
        param_refs = refs[1:-1]

        n = x_ref.shape[0]
        x = x_ref[...]  # bf16, (N, in_padded)

        # Mean-weights row for MXU-based axis-0 reductions.  Hoisted: one
        # broadcast, reused by every BN layer (JAX does not CSE broadcasts).
        mean_row = jnp.full((1, n), 1.0 / n, dtype=jnp.float32)

        idx = 0
        for i in range(layer_n):
            is_head_layer = head and (i == layer_n - 1)
            if is_head_layer:
                w_ref, b_ref = param_refs[idx], param_refs[idx + 1]
                idx += 2
                y = jnp.dot(x, w_ref[...], preferred_element_type=jnp.float32)
                x = y + b_ref[...]
            else:
                w_ref, g_ref, be_ref = param_refs[idx:idx + 3]
                idx += 3
                # Linear WITHOUT bias: the bias is exactly cancelled by the BN
                # mean subtraction, so it is never materialized.
                y = jnp.dot(x, w_ref[...], preferred_element_type=jnp.float32)
                # BatchNorm1d training-mode (biased) batch stats over dim 0.
                # Two-pass centered variance; both cross-sublane reductions go
                # to the MXU via a ones-row matmul (XLU stays free).
                mean = jnp.dot(mean_row, y, preferred_element_type=jnp.float32)
                centered = y - mean
                var = jnp.dot(mean_row, centered * centered,
                              preferred_element_type=jnp.float32)
                scale = g_ref[...] * jax.lax.rsqrt(var + BN_EPS)  # EUP rsqrt
                act = jnp.maximum(centered * scale + be_ref[...], 0.0)
                # Carry next-layer activations in bf16 (MXU operand fast path,
                # halves vreg pressure); keep the final output in f32.
                x = act.astype(jnp.bfloat16) if i < layer_n - 1 else act

        o_ref[...] = x.astype(o_ref.dtype)

    return kernel


def init_mlp_params(key, input_dim, output_dim, hidden_dim=(64,)):
    """Deterministic init matching PyTorch Linear/BatchNorm1d defaults (unpadded)."""
    dims = [input_dim] + list(hidden_dim) + [output_dim]
    layer_n = len(hidden_dim) + 1
    params = []
    for i in range(layer_n):
        fan_in, fan_out = dims[i], dims[i + 1]
        key, kw, kb = jax.random.split(key, 3)
        bound = fan_in ** -0.5
        # weight stored as (in, out) so the kernel does x @ w directly
        w = jax.random.uniform(kw, (fan_in, fan_out), jnp.float32, -bound, bound)
        b = jax.random.uniform(kb, (fan_out,), jnp.float32, -bound, bound)
        gamma = jnp.ones((fan_out,), jnp.float32)   # BatchNorm1d default weight
        beta = jnp.zeros((fan_out,), jnp.float32)   # BatchNorm1d default bias
        params.append(dict(w=w, b=b, gamma=gamma, beta=beta))
    return params


def pad_mlp_params(params):
    """Lane-pad every layer to multiples of 128 and store weights in bf16.

    Both the contraction dim (including the first layer's input_dim) and the
    output-feature dim are zero-padded.  Padded lanes produce exactly 0 through
    the matmul (zero weight rows/cols), BN (gamma pad = 0) and ReLU, and the
    next layer's padded weight rows are 0, so results are unaffected.
    """
    padded = []
    prev_in = _round_up(params[0]["w"].shape[0], LANE)
    for p in params:
        fan_in, fan_out = p["w"].shape
        out_p = _round_up(fan_out, LANE)
        w = (jnp.zeros((prev_in, out_p), jnp.float32)
             .at[:fan_in, :fan_out].set(p["w"])).astype(jnp.bfloat16)
        b = jnp.zeros((1, out_p), jnp.float32).at[0, :fan_out].set(p["b"])
        g = jnp.zeros((1, out_p), jnp.float32).at[0, :fan_out].set(p["gamma"])
        be = jnp.zeros((1, out_p), jnp.float32).at[0, :fan_out].set(p["beta"])
        padded.append(dict(w=w, b=b, gamma=g, beta=be))
        prev_in = out_p
    return padded


@functools.partial(jax.jit, static_argnames=("out_dim", "head"))
def mlp_forward(x, padded_params, *, out_dim, head=False):
    """Whole-MLP forward as a single fused Pallas kernel."""
    n = x.shape[0]
    layer_n = len(padded_params)
    kernel = _make_fused_mlp_kernel(layer_n, head)

    # Lane-pad the input features to the first weight's padded contraction dim
    # and cast to bf16 (lane-dense x load, aligned K, half the input DMA).
    in_p = padded_params[0]["w"].shape[0]
    x_p = jnp.zeros((n, in_p), jnp.bfloat16).at[:, : x.shape[1]].set(
        x.astype(jnp.bfloat16))

    args = [x_p]
    for i, p in enumerate(padded_params):
        if head and i == layer_n - 1:
            args += [p["w"], p["b"]]            # plain Linear head keeps bias
        else:
            args += [p["w"], p["gamma"], p["beta"]]  # bias dropped (BN-cancelled)

    out_dim_p = padded_params[-1]["w"].shape[1]
    out_shape = jax.ShapeDtypeStruct((n, out_dim_p), jnp.float32)

    vmem_spec = pl.BlockSpec(memory_space=pltpu.MemorySpace.VMEM)

    # Generation-aware VMEM budget: 64 MiB/TC on v7x vs 128 MiB on v5e/v6e.
    try:
        vmem_cap = int(pltpu.get_tpu_info().vmem_capacity_bytes)
    except Exception:
        vmem_cap = 64 * 1024 * 1024             # conservative fallback
    vmem_ceiling = (vmem_cap * 3) // 4          # headroom for compiler temps

    arg_bytes = sum(int(a.size) * a.dtype.itemsize for a in args)
    out_bytes = n * out_dim_p * 4
    max_feat = max(int(p["w"].shape[1]) for p in padded_params)
    temp_bytes = 4 * n * max_feat * 4           # y / centered / act f32 temps
    resident_bytes = arg_bytes + out_bytes + temp_bytes
    if resident_bytes > vmem_ceiling:
        raise ValueError(
            "Fused whole-network-resident MLP working set "
            f"({resident_bytes} B) exceeds the VMEM budget ({vmem_ceiling} B); "
            "a batch/weight-tiled variant is required for these shapes.")
    vmem_limit = int(min(vmem_ceiling, max(2 * resident_bytes, 16 << 20)))

    flops = 2 * n * sum(int(p["w"].shape[0]) * int(p["w"].shape[1])
                        for p in padded_params)
    bn_layers = layer_n - (1 if head else 0)
    flops += sum(9 * n * int(padded_params[i]["w"].shape[1])
                 for i in range(bn_layers))     # BN reductions + elementwise
    transcendentals = sum(int(padded_params[i]["w"].shape[1])
                          for i in range(bn_layers))

    out = pl.pallas_call(
        kernel,
        out_shape=out_shape,
        in_specs=[vmem_spec] * len(args),
        out_specs=vmem_spec,
        compiler_params=pltpu.CompilerParams(vmem_limit_bytes=vmem_limit),
        cost_estimate=pl.CostEstimate(
            flops=int(flops),
            transcendentals=int(transcendentals),
            bytes_accessed=int(arg_bytes + out_bytes),
        ),
    )(*args)

    # Strip lane padding back to the true feature width.
    return out[:, :out_dim]


def mlp_reference(x, raw_params, head=False, matmul_dtype=jnp.float32):
    """Pure-JAX reference with PyTorch train-mode BatchNorm1d semantics.

    matmul_dtype=jnp.bfloat16 mirrors the kernel's MXU operand precision
    (accumulation stays f32); matmul_dtype=f32 is the exact PyTorch math.
    """
    def dense(v, p):
        y = jnp.dot(v.astype(matmul_dtype), p["w"].astype(matmul_dtype),
                    preferred_element_type=jnp.float32)
        return y + p["b"]

    def bn_relu(y, p):
        mean = jnp.mean(y, axis=0, keepdims=True)
        var = jnp.mean((y - mean) ** 2, axis=0, keepdims=True)  # biased
        return jnp.maximum(
            p["gamma"] * (y - mean) * jax.lax.rsqrt(var + BN_EPS) + p["beta"],
            0.0)

    layer_n = len(raw_params)
    for i in range(layer_n - 1):
        x = bn_relu(dense(x, raw_params[i]), raw_params[i])
    y = dense(x, raw_params[-1])
    return y if head else bn_relu(y, raw_params[-1])


if __name__ == "__main__":
    key = jax.random.PRNGKey(0)
    k_in, k_param = jax.random.split(key)

    batch = 8
    input_dim = 16
    hidden_dim = (64,)
    output_dim = 32

    x = jax.random.normal(k_in, (batch, input_dim), jnp.float32)
    raw_params = init_mlp_params(k_param, input_dim, output_dim, hidden_dim)
    params = pad_mlp_params(raw_params)

    # head=False path (Linear -> BN -> ReLU on every layer, incl. the last)
    out = mlp_forward(x, params, out_dim=output_dim, head=False)
    jax.block_until_ready(out)
    assert out.shape == (batch, output_dim), out.shape

    ref_matched = mlp_reference(x, raw_params, head=False,
                                matmul_dtype=jnp.bfloat16)
    err_m = float(jnp.max(jnp.abs(out - ref_matched)))
    assert jnp.allclose(out, ref_matched, atol=5e-3, rtol=5e-3), err_m

    ref_f32 = mlp_reference(x, raw_params, head=False)
    err_f = float(jnp.max(jnp.abs(out - ref_f32)))
    assert jnp.allclose(out, ref_f32, atol=1e-1, rtol=5e-2), err_f

    # head=True path (plain Linear last layer, bias kept)
    out_h = mlp_forward(x, params, out_dim=output_dim, head=True)
    jax.block_until_ready(out_h)
    ref_h = mlp_reference(x, raw_params, head=True, matmul_dtype=jnp.bfloat16)
    err_h = float(jnp.max(jnp.abs(out_h - ref_h)))
    assert jnp.allclose(out_h, ref_h, atol=5e-3, rtol=5e-3), err_h

    print("KERNEL_OK")
</pallas_src>

<mosaic_0001>
module attributes {stable_mosaic.version = 11 : i64} {
  func.func @kernel(%arg0: memref<8x128xbf16, #tpu.memory_space<vmem>>, %arg1: memref<128x128xbf16, #tpu.memory_space<vmem>>, %arg2: memref<1x128xf32, #tpu.memory_space<vmem>>, %arg3: memref<1x128xf32, #tpu.memory_space<vmem>>, %arg4: memref<128x128xbf16, #tpu.memory_space<vmem>>, %arg5: memref<1x128xf32, #tpu.memory_space<vmem>>, %arg6: memref<1x128xf32, #tpu.memory_space<vmem>>, %arg7: memref<8x128xf32, #tpu.memory_space<vmem>>) attributes {dimension_semantics = [], scalar_prefetch = 0 : i64, scratch_operands = 0 : i64, tpu.core_type = #tpu.core_type<tc>} {
    %c0 = arith.constant 0 : index
    %c0_0 = arith.constant 0 : index
    %0 = vector.load %arg0[%c0, %c0_0] : memref<8x128xbf16, #tpu.memory_space<vmem>>, vector<8x128xbf16>
    %cst = arith.constant 1.250000e-01 : f32
    %1 = vector.broadcast %cst : f32 to vector<1x8xf32>
    %c0_1 = arith.constant 0 : index
    %c0_2 = arith.constant 0 : index
    %2 = vector.load %arg1[%c0_1, %c0_2] : memref<128x128xbf16, #tpu.memory_space<vmem>>, vector<128x128xbf16>
    %cst_3 = arith.constant dense<0.000000e+00> : vector<8x128xf32>
    %3 = tpu.matmul %0, %2, %cst_3 {dimension_numbers = #tpu.dot_dimension_numbers<[1], [0], [0], [1], [0, 0, 1, 1], [], []>} : vector<8x128xbf16>, vector<128x128xbf16>, vector<8x128xf32> -> vector<8x128xf32>
    %cst_4 = arith.constant dense<0.000000e+00> : vector<1x128xf32>
    %4 = tpu.matmul %1, %3, %cst_4 {dimension_numbers = #tpu.dot_dimension_numbers<[1], [0], [0], [1], [0, 0, 1, 1], [], []>} : vector<1x8xf32>, vector<8x128xf32>, vector<1x128xf32> -> vector<1x128xf32>
    %5 = vector.broadcast %4 : vector<1x128xf32> to vector<8x128xf32>
    %6 = arith.subf %3, %5 : vector<8x128xf32>
    %7 = arith.mulf %6, %6 : vector<8x128xf32>
    %cst_5 = arith.constant dense<0.000000e+00> : vector<1x128xf32>
    %8 = tpu.matmul %1, %7, %cst_5 {dimension_numbers = #tpu.dot_dimension_numbers<[1], [0], [0], [1], [0, 0, 1, 1], [], []>} : vector<1x8xf32>, vector<8x128xf32>, vector<1x128xf32> -> vector<1x128xf32>
    %c0_6 = arith.constant 0 : index
    %c0_7 = arith.constant 0 : index
    %9 = vector.load %arg2[%c0_6, %c0_7] : memref<1x128xf32, #tpu.memory_space<vmem>>, vector<1x128xf32>
    %cst_8 = arith.constant 9.99999974E-6 : f32
    %10 = vector.broadcast %cst_8 : f32 to vector<1x128xf32>
    %11 = arith.addf %8, %10 : vector<1x128xf32>
    %12 = math.rsqrt %11 : vector<1x128xf32>
    %13 = arith.mulf %9, %12 : vector<1x128xf32>
    %14 = vector.broadcast %13 : vector<1x128xf32> to vector<8x128xf32>
    %15 = arith.mulf %6, %14 : vector<8x128xf32>
    %c0_9 = arith.constant 0 : index
    %c0_10 = arith.constant 0 : index
    %16 = vector.load %arg3[%c0_9, %c0_10] : memref<1x128xf32, #tpu.memory_space<vmem>>, vector<1x128xf32>
    %17 = vector.broadcast %16 : vector<1x128xf32> to vector<8x128xf32>
    %18 = arith.addf %15, %17 : vector<8x128xf32>
    %cst_11 = arith.constant 0.000000e+00 : f32
    %19 = vector.broadcast %cst_11 : f32 to vector<8x128xf32>
    %20 = arith.maximumf %18, %19 : vector<8x128xf32>
    %21 = arith.truncf %20 : vector<8x128xf32> to vector<8x128xbf16>
    %c0_12 = arith.constant 0 : index
    %c0_13 = arith.constant 0 : index
    %22 = vector.load %arg4[%c0_12, %c0_13] : memref<128x128xbf16, #tpu.memory_space<vmem>>, vector<128x128xbf16>
    %cst_14 = arith.constant dense<0.000000e+00> : vector<8x128xf32>
    %23 = tpu.matmul %21, %22, %cst_14 {dimension_numbers = #tpu.dot_dimension_numbers<[1], [0], [0], [1], [0, 0, 1, 1], [], []>} : vector<8x128xbf16>, vector<128x128xbf16>, vector<8x128xf32> -> vector<8x128xf32>
    %cst_15 = arith.constant dense<0.000000e+00> : vector<1x128xf32>
    %24 = tpu.matmul %1, %23, %cst_15 {dimension_numbers = #tpu.dot_dimension_numbers<[1], [0], [0], [1], [0, 0, 1, 1], [], []>} : vector<1x8xf32>, vector<8x128xf32>, vector<1x128xf32> -> vector<1x128xf32>
    %25 = vector.broadcast %24 : vector<1x128xf32> to vector<8x128xf32>
    %26 = arith.subf %23, %25 : vector<8x128xf32>
    %27 = arith.mulf %26, %26 : vector<8x128xf32>
    %cst_16 = arith.constant dense<0.000000e+00> : vector<1x128xf32>
    %28 = tpu.matmul %1, %27, %cst_16 {dimension_numbers = #tpu.dot_dimension_numbers<[1], [0], [0], [1], [0, 0, 1, 1], [], []>} : vector<1x8xf32>, vector<8x128xf32>, vector<1x128xf32> -> vector<1x128xf32>
    %c0_17 = arith.constant 0 : index
    %c0_18 = arith.constant 0 : index
    %29 = vector.load %arg5[%c0_17, %c0_18] : memref<1x128xf32, #tpu.memory_space<vmem>>, vector<1x128xf32>
    %cst_19 = arith.constant 9.99999974E-6 : f32
    %30 = vector.broadcast %cst_19 : f32 to vector<1x128xf32>
    %31 = arith.addf %28, %30 : vector<1x128xf32>
    %32 = math.rsqrt %31 : vector<1x128xf32>
    %33 = arith.mulf %29, %32 : vector<1x128xf32>
    %34 = vector.broadcast %33 : vector<1x128xf32> to vector<8x128xf32>
    %35 = arith.mulf %26, %34 : vector<8x128xf32>
    %c0_20 = arith.constant 0 : index
    %c0_21 = arith.constant 0 : index
    %36 = vector.load %arg6[%c0_20, %c0_21] : memref<1x128xf32, #tpu.memory_space<vmem>>, vector<1x128xf32>
    %37 = vector.broadcast %36 : vector<1x128xf32> to vector<8x128xf32>
    %38 = arith.addf %35, %37 : vector<8x128xf32>
    %cst_22 = arith.constant 0.000000e+00 : f32
    %39 = vector.broadcast %cst_22 : f32 to vector<8x128xf32>
    %40 = arith.maximumf %38, %39 : vector<8x128xf32>
    %c0_23 = arith.constant 0 : index
    %c0_24 = arith.constant 0 : index
    %41 = vector.load %arg7[%c0_23, %c0_24] : memref<8x128xf32, #tpu.memory_space<vmem>>, vector<8x128xf32>
    tpu.vector_store %arg7[%c0_23, %c0_24], %40 {strides = array<i32>} : memref<8x128xf32, #tpu.memory_space<vmem>>, vector<8x128xf32>,
    return
  }
}

</mosaic_0001>

<llo_original>
// kernel: mlp_forward.1
$region0: #{mlp_forward.1}
  #allocation0 [shape = 'u32[]', space=smem, size = 0x4, offset = 0x4, fixed_abs, tag = 'smem constant byte address 0x4 - core index']
  #allocation1 [shape = 'u32[144,128]{1,0:T(1,128)}', space=vmem, size = 0x12000, scoped, tag = 'internal scratch']
  %s0 = inlined_call_operand.vmem [shape: bf16[8,128], index: 0, kind: input, shape index: {}]
  %s1 = inlined_call_operand.hbm [shape: bf16[128,128], index: 1, kind: input, shape index: {}]
  %s2 = inlined_call_operand.vmem [shape: f32[1,128], index: 2, kind: input, shape index: {}]
  %s3 = inlined_call_operand.vmem [shape: f32[1,128], index: 3, kind: input, shape index: {}]
  %s4 = inlined_call_operand.hbm [shape: bf16[128,128], index: 4, kind: input, shape index: {}]
  %s5 = inlined_call_operand.vmem [shape: f32[1,128], index: 5, kind: input, shape index: {}]
  %s6 = inlined_call_operand.vmem [shape: f32[1,128], index: 6, kind: input, shape index: {}]
  %s7 = inlined_call_operand.hbm [shape: f32[8,128], index: 7, kind: output, shape index: {}]
  %s8 = sld [smem:[#allocation0]]
  $region46: #{mlp_forward.1} parent=0
    _
  %s10 = ssub.s32 1, %s8
  %s11 = scalar_select 0, %s10, %s8
  $region1: #{mlp_forward.1} parent=0
    #allocation2 [shape = 'u8[32768]{0}', space=vmem, size = 0x8000, scoped, tag = 'input window, operand 1, single buffered']
    #allocation3 [shape = 's32[1]{0}', space=sflag, size = 0x4, scoped, tag = 'scoped memory for mlp_forward.1']
    #allocation4 [shape = 's32[1]{0}', space=sflag, size = 0x4, scoped, tag = 'scoped memory for mlp_forward.1']
    #allocation5 [shape = 'u8[32768]{0}', space=vmem, size = 0x8000, scoped, tag = 'input window, operand 4, single buffered']
    #allocation6 [shape = 's32[1]{0}', space=sflag, size = 0x4, scoped, tag = 'scoped memory for mlp_forward.1']
    #allocation7 [shape = 'u8[4096]{0}', space=vmem, size = 0x1000, scoped, tag = 'output window, operand 0, single buffered']
    %12 = vsyncpa [#allocation3], 0
    %13 = vsyncpa [#allocation6], 0
    %14 = vsyncpa [#allocation4], 0
    // Predicated region
    $region2: #{mlp_forward.1} parent=1 // pred_check
      _
    $region3: #{mlp_forward.1} parent=1 // pred_check_branch
      %16 = sbr.rel (0) target = $region5
    $region4: #{mlp_forward.1} parent=1 // pred_region
      _
    $region5: #{mlp_forward.1} parent=1 // pred_fallthru
      _
    // Predicated region
    $region6: #{mlp_forward.1} parent=1 // pred_check
      _
    $region7: #{mlp_forward.1} parent=1 // pred_check_branch
      %18 = sbr.rel (0) target = $region9
    $region8: #{mlp_forward.1} parent=1 // pred_region
      %s20 = ssub.s32 1024, 1024
      %21 = vsyncadd [#allocation3], %s20
      %s22 = sshll.u32 [#allocation2], 4
      %s23 = int_to_ptr.vmem [resolvable:$true] %s22
      %28 = dma.hbm_to_vmem [thread:$0]  %s1, 1024, %s23, [#allocation3], 64, 64, 4
    $region9: #{mlp_forward.1} parent=1 // pred_fallthru
      _
    // Predicated region
    $region10: #{mlp_forward.1} parent=1 // pred_check
      _
    $region11: #{mlp_forward.1} parent=1 // pred_check_branch
      %30 = sbr.rel (0) target = $region13
    $region12: #{mlp_forward.1} parent=1 // pred_region
      _
    $region13: #{mlp_forward.1} parent=1 // pred_fallthru
      _
    // Predicated region
    $region14: #{mlp_forward.1} parent=1 // pred_check
      _
    $region15: #{mlp_forward.1} parent=1 // pred_check_branch
      %32 = sbr.rel (0) target = $region17
    $region16: #{mlp_forward.1} parent=1 // pred_region
      _
    $region17: #{mlp_forward.1} parent=1 // pred_fallthru
      _
    // Predicated region
    $region18: #{mlp_forward.1} parent=1 // pred_check
      _
    $region19: #{mlp_forward.1} parent=1 // pred_check_branch
      %34 = sbr.rel (0) target = $region21
    $region20: #{mlp_forward.1} parent=1 // pred_region
      %s36 = ssub.s32 1024, 1024
      %37 = vsyncadd [#allocation6], %s36
      %s38 = sshll.u32 [#allocation5], 4
      %s39 = int_to_ptr.vmem [resolvable:$true] %s38
      %44 = dma.hbm_to_vmem [thread:$0]  %s4, 1024, %s39, [#allocation6], 64, 64, 4
    $region21: #{mlp_forward.1} parent=1 // pred_fallthru
      _
    // Predicated region
    $region22: #{mlp_forward.1} parent=1 // pred_check
      _
    $region23: #{mlp_forward.1} parent=1 // pred_check_branch
      %46 = sbr.rel (0) target = $region25
    $region24: #{mlp_forward.1} parent=1 // pred_region
      _
    $region25: #{mlp_forward.1} parent=1 // pred_fallthru
      _
    // Predicated region
    $region26: #{mlp_forward.1} parent=1 // pred_check
      _
    $region27: #{mlp_forward.1} parent=1 // pred_check_branch
      %48 = sbr.rel (0) target = $region29
    $region28: #{mlp_forward.1} parent=1 // pred_region
      _
    $region29: #{mlp_forward.1} parent=1 // pred_fallthru
      _
    // Predicated region
    $region30: #{mlp_forward.1} parent=1 // pred_check
      _
    $region31: #{mlp_forward.1} parent=1 // pred_check_branch
      %50 = sbr.rel (0) target = $region33
    $region32: #{mlp_forward.1} parent=1 // pred_region
      %51 = dma.done [#allocation3], 1024
    $region33: #{mlp_forward.1} parent=1 // pred_fallthru
      _
    // Predicated region
    $region34: #{mlp_forward.1} parent=1 // pred_check
      _
    $region35: #{mlp_forward.1} parent=1 // pred_check_branch
      %53 = sbr.rel (0) target = $region37
    $region36: #{mlp_forward.1} parent=1 // pred_region
      %54 = dma.done [#allocation6], 1024
    $region37: #{mlp_forward.1} parent=1 // pred_fallthru
      _
    %v56 = vld [vmem:[%s0] sm:$0xf]
    %v57 = vld [vmem:[#allocation2] sm:$0xf]
    %v58 = vld [vmem:[#allocation2 + $0x4] sm:$0xf]
    %v59 = vld [vmem:[#allocation2 + $0x8] sm:$0xf]
    %v60 = vld [vmem:[#allocation2 + $0xc] sm:$0xf]
    %v61 = vld [vmem:[#allocation2 + $0x10] sm:$0xf]
    %v62 = vld [vmem:[#allocation2 + $0x14] sm:$0xf]
    %v63 = vld [vmem:[#allocation2 + $0x18] sm:$0xf]
    %v64 = vld [vmem:[#allocation2 + $0x1c] sm:$0xf]
    %v65 = vld [vmem:[#allocation2 + $0x20] sm:$0xf]
    %v66 = vld [vmem:[#allocation2 + $0x24] sm:$0xf]
    %v67 = vld [vmem:[#allocation2 + $0x28] sm:$0xf]
    %v68 = vld [vmem:[#allocation2 + $0x2c] sm:$0xf]
    %v69 = vld [vmem:[#allocation2 + $0x30] sm:$0xf]
    %v70 = vld [vmem:[#allocation2 + $0x34] sm:$0xf]
    %v71 = vld [vmem:[#allocation2 + $0x38] sm:$0xf]
    %v72 = vld [vmem:[#allocation2 + $0x3c] sm:$0xf]
    %v89 = vunpack.c.l.b16 %v57
    %v90 = vunpack.c.l.b16 %v58
    %v91 = vunpack.c.l.b16 %v59
    %v92 = vunpack.c.l.b16 %v60
    %v93 = vunpack.c.l.b16 %v61
    %v94 = vunpack.c.l.b16 %v62
    %v95 = vunpack.c.l.b16 %v63
    %v96 = vunpack.c.l.b16 %v64
    %v97 = vunpack.c.l.b16 %v65
    %v98 = vunpack.c.l.b16 %v66
    %v99 = vunpack.c.l.b16 %v67
    %v100 = vunpack.c.l.b16 %v68
    %v101 = vunpack.c.l.b16 %v69
    %v102 = vunpack.c.l.b16 %v70
    %v103 = vunpack.c.l.b16 %v71
    %v104 = vunpack.c.l.b16 %v72
    %v105 = vpack.c.b16 %v90, %v89
    %v106 = vpack.c.b16 %v92, %v91
    %v107 = vpack.c.b16 %v94, %v93
    %v108 = vpack.c.b16 %v96, %v95
    %v109 = vpack.c.b16 %v98, %v97
    %v110 = vpack.c.b16 %v100, %v99
    %v111 = vpack.c.b16 %v102, %v101
    %v112 = vpack.c.b16 %v104, %v103
    %121 = vmatprep.subr.bf16.mxu0 0
    %122 = vmatpush1.bf16.msra.mxu0 %v105
    %123 = vmatprep.subr.bf16.mxu0 0
    %124 = vmatpush1.bf16.msra.mxu0 %v106
    %125 = vmatprep.subr.bf16.mxu0 0
    %126 = vmatpush1.bf16.msra.mxu0 %v107
    %127 = vmatprep.subr.bf16.mxu0 0
    %128 = vmatpush1.bf16.msra.mxu0 %v108
    %129 = vmatprep.subr.bf16.mxu0 0
    %130 = vmatpush1.bf16.msra.mxu0 %v109
    %131 = vmatprep.subr.bf16.mxu0 0
    %132 = vmatpush1.bf16.msra.mxu0 %v110
    %133 = vmatprep.subr.bf16.mxu0 0
    %134 = vmatpush1.bf16.msra.mxu0 %v111
    %135 = vmatprep.subr.bf16.mxu0 0
    %136 = vmatpush1.bf16.msra.mxu0 %v112
    %137 = vmatprep.subr.bf16.mxu0 0
    %138 = vmatpush1.bf16.msra.mxu0 0
    %139 = vmatprep.subr.bf16.mxu0 0
    %140 = vmatpush1.bf16.msra.mxu0 0
    %141 = vmatprep.subr.bf16.mxu0 0
    %142 = vmatpush1.bf16.msra.mxu0 0
    %143 = vmatprep.subr.bf16.mxu0 0
    %144 = vmatpush1.bf16.msra.mxu0 0
    %145 = vmatprep.subr.bf16.mxu0 0
    %146 = vmatpush1.bf16.msra.mxu0 0
    %147 = vmatprep.subr.bf16.mxu0 0
    %148 = vmatpush1.bf16.msra.mxu0 0
    %149 = vmatprep.subr.bf16.mxu0 0
    %150 = vmatpush1.bf16.msra.mxu0 0
    %151 = vmatprep.subr.bf16.mxu0 0
    %152 = vmatpush1.bf16.msra.mxu0 0
    %153 = vmatprep.mubr.bf16.mxu0 0
    %154 = vmatmul.mubr.bf16.gmra.mrb[0].mxu0 %v56
    %v155 = vpop.f32.mrb[0].mxu0
    %v156 = vadd.f32 0.0, %v155
    %v157 = vpop.f32.mrb[0].mxu0
    %v158 = vpop.f32.mrb[0].mxu0
    %v159 = vpop.f32.mrb[0].mxu0
    %160 = vdwg.mxu0
    %vm161 = vcmask 64512
    %v163 = vsel %vm161, 0.125, 0
    %165 = vmatprep.subr.mxu0 0.0
    %166 = vmatpush1.msra.mxu0 %v156
    %167 = vmatprep.subr.mxu0 0.0
    %168 = vmatpush1.msra.mxu0 0.0
    %169 = vmatprep.subr.mxu0 0.0
    %170 = vmatpush1.msra.mxu0 0.0
    %171 = vmatprep.subr.mxu0 0.0
    %172 = vmatpush1.msra.mxu0 0.0
    %173 = vmatprep.subr.mxu0 0.0
    %174 = vmatpush1.msra.mxu0 0.0
    %175 = vmatprep.subr.mxu0 0.0
    %176 = vmatpush1.msra.mxu0 0.0
    %177 = vmatprep.subr.mxu0 0.0
    %178 = vmatpush1.msra.mxu0 0.0
    %179 = vmatprep.subr.mxu0 0.0
    %180 = vmatpush1.msra.mxu0 0.0
    %181 = vmatprep.subr.mxu0 0.0
    %182 = vmatpush1.msra.mxu0 0.0
    %183 = vmatprep.subr.mxu0 0.0
    %184 = vmatpush1.msra.mxu0 0.0
    %185 = vmatprep.subr.mxu0 0.0
    %186 = vmatpush1.msra.mxu0 0.0
    %187 = vmatprep.subr.mxu0 0.0
    %188 = vmatpush1.msra.mxu0 0.0
    %189 = vmatprep.subr.mxu0 0.0
    %190 = vmatpush1.msra.mxu0 0.0
    %191 = vmatprep.subr.mxu0 0.0
    %192 = vmatpush1.msra.mxu0 0.0
    %193 = vmatprep.subr.mxu0 0.0
    %194 = vmatpush1.msra.mxu0 0.0
    %195 = vmatprep.subr.mxu0 0.0
    %196 = vmatpush1.msra.mxu0 0.0
    %197 = vmatprep.subr.mxu0 0.0
    %198 = vmatpush1.msra.mxu0 0.0
    %199 = vmatprep.subr.mxu0 0.0
    %200 = vmatpush1.msra.mxu0 0.0
    %201 = vmatprep.subr.mxu0 0.0
    %202 = vmatpush1.msra.mxu0 0.0
    %203 = vmatprep.subr.mxu0 0.0
    %204 = vmatpush1.msra.mxu0 0.0
    %205 = vmatprep.subr.mxu0 0.0
    %206 = vmatpush1.msra.mxu0 0.0
    %207 = vmatprep.subr.mxu0 0.0
    %208 = vmatpush1.msra.mxu0 0.0
    %209 = vmatprep.subr.mxu0 0.0
    %210 = vmatpush1.msra.mxu0 0.0
    %211 = vmatprep.subr.mxu0 0.0
    %212 = vmatpush1.msra.mxu0 0.0
    %213 = vmatprep.subr.mxu0 0.0
    %214 = vmatpush1.msra.mxu0 0.0
    %215 = vmatprep.subr.mxu0 0.0
    %216 = vmatpush1.msra.mxu0 0.0
    %217 = vmatprep.subr.mxu0 0.0
    %218 = vmatpush1.msra.mxu0 0.0
    %219 = vmatprep.subr.mxu0 0.0
    %220 = vmatpush1.msra.mxu0 0.0
    %221 = vmatprep.subr.mxu0 0.0
    %222 = vmatpush1.msra.mxu0 0.0
    %223 = vmatprep.subr.mxu0 0.0
    %224 = vmatpush1.msra.mxu0 0.0
    %225 = vmatprep.subr.mxu0 0.0
    %226 = vmatpush1.msra.mxu0 0.0
    %227 = vmatprep.subr.mxu0 0.0
    %228 = vmatpush1.msra.mxu0 0.0
    %229 = vmatprep.mubr.f32.mxu0 0.0
    %230 = vmatmul.mubr.f32.gmra.mrb[0].mxu0 %v163
    %v231 = vpop.f32.mrb[0].mxu0
    %v232 = vadd.f32 0.0, %v231
    %v233 = vpop.f32.mrb[0].mxu0
    %234 = vdwg.mxu0
    %v235 = vlaneseq
    %v236 = vshrl.u32 %v235, 7
    %v237 = vsub.s32 0, %v236
    %v238 = vrot.slane %v232, %v237
    %v239 = vsub.f32 %v156, %v238
    %v240 = vmul.f32 %v239, %v239
    %v241 = vld [vmem:[%s2] sm:$0x1]
    %242 = vmatprep.subr.mxu0 0.0
    %243 = vmatpush1.msra.mxu0 %v240
    %244 = vmatprep.subr.mxu0 0.0
    %245 = vmatpush1.msra.mxu0 0.0
    %246 = vmatprep.subr.mxu0 0.0
    %247 = vmatpush1.msra.mxu0 0.0
    %248 = vmatprep.subr.mxu0 0.0
    %249 = vmatpush1.msra.mxu0 0.0
    %250 = vmatprep.subr.mxu0 0.0
    %251 = vmatpush1.msra.mxu0 0.0
    %252 = vmatprep.subr.mxu0 0.0
    %253 = vmatpush1.msra.mxu0 0.0
    %254 = vmatprep.subr.mxu0 0.0
    %255 = vmatpush1.msra.mxu0 0.0
    %256 = vmatprep.subr.mxu0 0.0
    %257 = vmatpush1.msra.mxu0 0.0
    %258 = vmatprep.subr.mxu0 0.0
    %259 = vmatpush1.msra.mxu0 0.0
    %260 = vmatprep.subr.mxu0 0.0
    %261 = vmatpush1.msra.mxu0 0.0
    %262 = vmatprep.subr.mxu0 0.0
    %263 = vmatpush1.msra.mxu0 0.0
    %264 = vmatprep.subr.mxu0 0.0
    %265 = vmatpush1.msra.mxu0 0.0
    %266 = vmatprep.subr.mxu0 0.0
    %267 = vmatpush1.msra.mxu0 0.0
    %268 = vmatprep.subr.mxu0 0.0
    %269 = vmatpush1.msra.mxu0 0.0
    %270 = vmatprep.subr.mxu0 0.0
    %271 = vmatpush1.msra.mxu0 0.0
    %272 = vmatprep.subr.mxu0 0.0
    %273 = vmatpush1.msra.mxu0 0.0
    %274 = vmatprep.subr.mxu0 0.0
    %275 = vmatpush1.msra.mxu0 0.0
    %276 = vmatprep.subr.mxu0 0.0
    %277 = vmatpush1.msra.mxu0 0.0
    %278 = vmatprep.subr.mxu0 0.0
    %279 = vmatpush1.msra.mxu0 0.0
    %280 = vmatprep.subr.mxu0 0.0
    %281 = vmatpush1.msra.mxu0 0.0
    %282 = vmatprep.subr.mxu0 0.0
    %283 = vmatpush1.msra.mxu0 0.0
    %284 = vmatprep.subr.mxu0 0.0
    %285 = vmatpush1.msra.mxu0 0.0
    %286 = vmatprep.subr.mxu0 0.0
    %287 = vmatpush1.msra.mxu0 0.0
    %288 = vmatprep.subr.mxu0 0.0
    %289 = vmatpush1.msra.mxu0 0.0
    %290 = vmatprep.subr.mxu0 0.0
    %291 = vmatpush1.msra.mxu0 0.0
    %292 = vmatprep.subr.mxu0 0.0
    %293 = vmatpush1.msra.mxu0 0.0
    %294 = vmatprep.subr.mxu0 0.0
    %295 = vmatpush1.msra.mxu0 0.0
    %296 = vmatprep.subr.mxu0 0.0
    %297 = vmatpush1.msra.mxu0 0.0
    %298 = vmatprep.subr.mxu0 0.0
    %299 = vmatpush1.msra.mxu0 0.0
    %300 = vmatprep.subr.mxu0 0.0
    %301 = vmatpush1.msra.mxu0 0.0
    %302 = vmatprep.subr.mxu0 0.0
    %303 = vmatpush1.msra.mxu0 0.0
    %304 = vmatprep.subr.mxu0 0.0
    %305 = vmatpush1.msra.mxu0 0.0
    %306 = vmatprep.mubr.f32.mxu0 0.0
    %307 = vmatmul.mubr.f32.gmra.mrb[0].mxu0 %v163
    %v308 = vpop.f32.mrb[0].mxu0
    %v309 = vadd.f32 1e-05, %v308
    %v310 = vpop.f32.mrb[0].mxu0
    %311 = vdwg.mxu0
    %v312 = vrsqrt.pop %v309
    %v313 = vmul.f32 %v241, %v312
    %v315 = vlaneseq
    %v316 = vshrl.u32 %v315, 7
    %v317 = vsub.s32 0, %v316
    %v318 = vrot.slane %v313, %v317
    %v320 = vmul.f32 %v239, %v318
    %v321 = vld [vmem:[%s3] sm:$0x1]
    %v323 = vlaneseq
    %v324 = vshrl.u32 %v323, 7
    %v325 = vsub.s32 0, %v324
    %v326 = vrot.slane %v321, %v325
    %v328 = vadd.f32 %v320, %v326
    %v329 = vmax.f32 %v328, 0.0
    %v330 = vpack.c.bf16 %v329, %v329
    %v331 = vld [vmem:[#allocation5] sm:$0xf]
    %v332 = vld [vmem:[#allocation5 + $0x4] sm:$0xf]
    %v333 = vld [vmem:[#allocation5 + $0x8] sm:$0xf]
    %v334 = vld [vmem:[#allocation5 + $0xc] sm:$0xf]
    %v335 = vld [vmem:[#allocation5 + $0x10] sm:$0xf]
    %v336 = vld [vmem:[#allocation5 + $0x14] sm:$0xf]
    %v337 = vld [vmem:[#allocation5 + $0x18] sm:$0xf]
    %v338 = vld [vmem:[#allocation5 + $0x1c] sm:$0xf]
    %v339 = vld [vmem:[#allocation5 + $0x20] sm:$0xf]
    %v340 = vld [vmem:[#allocation5 + $0x24] sm:$0xf]
    %v341 = vld [vmem:[#allocation5 + $0x28] sm:$0xf]
    %v342 = vld [vmem:[#allocation5 + $0x2c] sm:$0xf]
    %v343 = vld [vmem:[#allocation5 + $0x30] sm:$0xf]
    %v344 = vld [vmem:[#allocation5 + $0x34] sm:$0xf]
    %v345 = vld [vmem:[#allocation5 + $0x38] sm:$0xf]
    %v346 = vld [vmem:[#allocation5 + $0x3c] sm:$0xf]
    %v363 = vunpack.c.l.b16 %v331
    %v364 = vunpack.c.l.b16 %v332
    %v365 = vunpack.c.l.b16 %v333
    %v366 = vunpack.c.l.b16 %v334
    %v367 = vunpack.c.l.b16 %v335
    %v368 = vunpack.c.l.b16 %v336
    %v369 = vunpack.c.l.b16 %v337
    %v370 = vunpack.c.l.b16 %v338
    %v371 = vunpack.c.l.b16 %v339
    %v372 = vunpack.c.l.b16 %v340
    %v373 = vunpack.c.l.b16 %v341
    %v374 = vunpack.c.l.b16 %v342
    %v375 = vunpack.c.l.b16 %v343
    %v376 = vunpack.c.l.b16 %v344
    %v377 = vunpack.c.l.b16 %v345
    %v378 = vunpack.c.l.b16 %v346
    %v379 = vpack.c.b16 %v364, %v363
    %v380 = vpack.c.b16 %v366, %v365
    %v381 = vpack.c.b16 %v368, %v367
    %v382 = vpack.c.b16 %v370, %v369
    %v383 = vpack.c.b16 %v372, %v371
    %v384 = vpack.c.b16 %v374, %v373
    %v385 = vpack.c.b16 %v376, %v375
    %v386 = vpack.c.b16 %v378, %v377
    %395 = vmatprep.subr.bf16.mxu0 0
    %396 = vmatpush1.bf16.msra.mxu0 %v379
    %397 = vmatprep.subr.bf16.mxu0 0
    %398 = vmatpush1.bf16.msra.mxu0 %v380
    %399 = vmatprep.subr.bf16.mxu0 0
    %400 = vmatpush1.bf16.msra.mxu0 %v381
    %401 = vmatprep.subr.bf16.mxu0 0
    %402 = vmatpush1.bf16.msra.mxu0 %v382
    %403 = vmatprep.subr.bf16.mxu0 0
    %404 = vmatpush1.bf16.msra.mxu0 %v383
    %405 = vmatprep.subr.bf16.mxu0 0
    %406 = vmatpush1.bf16.msra.mxu0 %v384
    %407 = vmatprep.subr.bf16.mxu0 0
    %408 = vmatpush1.bf16.msra.mxu0 %v385
    %409 = vmatprep.subr.bf16.mxu0 0
    %410 = vmatpush1.bf16.msra.mxu0 %v386
    %411 = vmatprep.subr.bf16.mxu0 0
    %412 = vmatpush1.bf16.msra.mxu0 0
    %413 = vmatprep.subr.bf16.mxu0 0
    %414 = vmatpush1.bf16.msra.mxu0 0
    %415 = vmatprep.subr.bf16.mxu0 0
    %416 = vmatpush1.bf16.msra.mxu0 0
    %417 = vmatprep.subr.bf16.mxu0 0
    %418 = vmatpush1.bf16.msra.mxu0 0
    %419 = vmatprep.subr.bf16.mxu0 0
    %420 = vmatpush1.bf16.msra.mxu0 0
    %421 = vmatprep.subr.bf16.mxu0 0
    %422 = vmatpush1.bf16.msra.mxu0 0
    %423 = vmatprep.subr.bf16.mxu0 0
    %424 = vmatpush1.bf16.msra.mxu0 0
    %425 = vmatprep.subr.bf16.mxu0 0
    %426 = vmatpush1.bf16.msra.mxu0 0
    %427 = vmatprep.mubr.bf16.mxu0 0
    %428 = vmatmul.mubr.bf16.gmra.mrb[0].mxu0 %v330
    %v429 = vpop.f32.mrb[0].mxu0
    %v430 = vadd.f32 0.0, %v429
    %v431 = vpop.f32.mrb[0].mxu0
    %v432 = vpop.f32.mrb[0].mxu0
    %v433 = vpop.f32.mrb[0].mxu0
    %434 = vdwg.mxu0
    %435 = vmatprep.subr.mxu0 0.0
    %436 = vmatpush1.msra.mxu0 %v430
    %437 = vmatprep.subr.mxu0 0.0
    %438 = vmatpush1.msra.mxu0 0.0
    %439 = vmatprep.subr.mxu0 0.0
    %440 = vmatpush1.msra.mxu0 0.0
    %441 = vmatprep.subr.mxu0 0.0
    %442 = vmatpush1.msra.mxu0 0.0
    %443 = vmatprep.subr.mxu0 0.0
    %444 = vmatpush1.msra.mxu0 0.0
    %445 = vmatprep.subr.mxu0 0.0
    %446 = vmatpush1.msra.mxu0 0.0
    %447 = vmatprep.subr.mxu0 0.0
    %448 = vmatpush1.msra.mxu0 0.0
    %449 = vmatprep.subr.mxu0 0.0
    %450 = vmatpush1.msra.mxu0 0.0
    %451 = vmatprep.subr.mxu0 0.0
    %452 = vmatpush1.msra.mxu0 0.0
    %453 = vmatprep.subr.mxu0 0.0
    %454 = vmatpush1.msra.mxu0 0.0
    %455 = vmatprep.subr.mxu0 0.0
    %456 = vmatpush1.msra.mxu0 0.0
    %457 = vmatprep.subr.mxu0 0.0
    %458 = vmatpush1.msra.mxu0 0.0
    %459 = vmatprep.subr.mxu0 0.0
    %460 = vmatpush1.msra.mxu0 0.0
    %461 = vmatprep.subr.mxu0 0.0
    %462 = vmatpush1.msra.mxu0 0.0
    %463 = vmatprep.subr.mxu0 0.0
    %464 = vmatpush1.msra.mxu0 0.0
    %465 = vmatprep.subr.mxu0 0.0
    %466 = vmatpush1.msra.mxu0 0.0
    %467 = vmatprep.subr.mxu0 0.0
    %468 = vmatpush1.msra.mxu0 0.0
    %469 = vmatprep.subr.mxu0 0.0
    %470 = vmatpush1.msra.mxu0 0.0
    %471 = vmatprep.subr.mxu0 0.0
    %472 = vmatpush1.msra.mxu0 0.0
    %473 = vmatprep.subr.mxu0 0.0
    %474 = vmatpush1.msra.mxu0 0.0
    %475 = vmatprep.subr.mxu0 0.0
    %476 = vmatpush1.msra.mxu0 0.0
    %477 = vmatprep.subr.mxu0 0.0
    %478 = vmatpush1.msra.mxu0 0.0
    %479 = vmatprep.subr.mxu0 0.0
    %480 = vmatpush1.msra.mxu0 0.0
    %481 = vmatprep.subr.mxu0 0.0
    %482 = vmatpush1.msra.mxu0 0.0
    %483 = vmatprep.subr.mxu0 0.0
    %484 = vmatpush1.msra.mxu0 0.0
    %485 = vmatprep.subr.mxu0 0.0
    %486 = vmatpush1.msra.mxu0 0.0
    %487 = vmatprep.subr.mxu0 0.0
    %488 = vmatpush1.msra.mxu0 0.0
    %489 = vmatprep.subr.mxu0 0.0
    %490 = vmatpush1.msra.mxu0 0.0
    %491 = vmatprep.subr.mxu0 0.0
    %492 = vmatpush1.msra.mxu0 0.0
    %493 = vmatprep.subr.mxu0 0.0
    %494 = vmatpush1.msra.mxu0 0.0
    %495 = vmatprep.subr.mxu0 0.0
    %496 = vmatpush1.msra.mxu0 0.0
    %497 = vmatprep.subr.mxu0 0.0
    %498 = vmatpush1.msra.mxu0 0.0
    %499 = vmatprep.mubr.f32.mxu0 0.0
    %500 = vmatmul.mubr.f32.gmra.mrb[0].mxu0 %v163
    %v501 = vpop.f32.mrb[0].mxu0
    %v502 = vadd.f32 0.0, %v501
    %v503 = vpop.f32.mrb[0].mxu0
    %504 = vdwg.mxu0
    %v505 = vlaneseq
    %v506 = vshrl.u32 %v505, 7
    %v507 = vsub.s32 0, %v506
    %v508 = vrot.slane %v502, %v507
    %v509 = vsub.f32 %v430, %v508
    %v510 = vmul.f32 %v509, %v509
    %v511 = vld [vmem:[%s5] sm:$0x1]
    %512 = vmatprep.subr.mxu0 0.0
    %513 = vmatpush1.msra.mxu0 %v510
    %514 = vmatprep.subr.mxu0 0.0
    %515 = vmatpush1.msra.mxu0 0.0
    %516 = vmatprep.subr.mxu0 0.0
    %517 = vmatpush1.msra.mxu0 0.0
    %518 = vmatprep.subr.mxu0 0.0
    %519 = vmatpush1.msra.mxu0 0.0
    %520 = vmatprep.subr.mxu0 0.0
    %521 = vmatpush1.msra.mxu0 0.0
    %522 = vmatprep.subr.mxu0 0.0
    %523 = vmatpush1.msra.mxu0 0.0
    %524 = vmatprep.subr.mxu0 0.0
    %525 = vmatpush1.msra.mxu0 0.0
    %526 = vmatprep.subr.mxu0 0.0
    %527 = vmatpush1.msra.mxu0 0.0
    %528 = vmatprep.subr.mxu0 0.0
    %529 = vmatpush1.msra.mxu0 0.0
    %530 = vmatprep.subr.mxu0 0.0
    %531 = vmatpush1.msra.mxu0 0.0
    %532 = vmatprep.subr.mxu0 0.0
    %533 = vmatpush1.msra.mxu0 0.0
    %534 = vmatprep.subr.mxu0 0.0
    %535 = vmatpush1.msra.mxu0 0.0
    %536 = vmatprep.subr.mxu0 0.0
    %537 = vmatpush1.msra.mxu0 0.0
    %538 = vmatprep.subr.mxu0 0.0
    %539 = vmatpush1.msra.mxu0 0.0
    %540 = vmatprep.subr.mxu0 0.0
    %541 = vmatpush1.msra.mxu0 0.0
    %542 = vmatprep.subr.mxu0 0.0
    %543 = vmatpush1.msra.mxu0 0.0
    %544 = vmatprep.subr.mxu0 0.0
    %545 = vmatpush1.msra.mxu0 0.0
    %546 = vmatprep.subr.mxu0 0.0
    %547 = vmatpush1.msra.mxu0 0.0
    %548 = vmatprep.subr.mxu0 0.0
    %549 = vmatpush1.msra.mxu0 0.0
    %550 = vmatprep.subr.mxu0 0.0
    %551 = vmatpush1.msra.mxu0 0.0
    %552 = vmatprep.subr.mxu0 0.0
    %553 = vmatpush1.msra.mxu0 0.0
    %554 = vmatprep.subr.mxu0 0.0
    %555 = vmatpush1.msra.mxu0 0.0
    %556 = vmatprep.subr.mxu0 0.0
    %557 = vmatpush1.msra.mxu0 0.0
    %558 = vmatprep.subr.mxu0 0.0
    %559 = vmatpush1.msra.mxu0 0.0
    %560 = vmatprep.subr.mxu0 0.0
    %561 = vmatpush1.msra.mxu0 0.0
    %562 = vmatprep.subr.mxu0 0.0
    %563 = vmatpush1.msra.mxu0 0.0
    %564 = vmatprep.subr.mxu0 0.0
    %565 = vmatpush1.msra.mxu0 0.0
    %566 = vmatprep.subr.mxu0 0.0
    %567 = vmatpush1.msra.mxu0 0.0
    %568 = vmatprep.subr.mxu0 0.0
    %569 = vmatpush1.msra.mxu0 0.0
    %570 = vmatprep.subr.mxu0 0.0
    %571 = vmatpush1.msra.mxu0 0.0
    %572 = vmatprep.subr.mxu0 0.0
    %573 = vmatpush1.msra.mxu0 0.0
    %574 = vmatprep.subr.mxu0 0.0
    %575 = vmatpush1.msra.mxu0 0.0
    %576 = vmatprep.mubr.f32.mxu0 0.0
    %577 = vmatmul.mubr.f32.gmra.mrb[0].mxu0 %v163
    %v578 = vpop.f32.mrb[0].mxu0
    %v579 = vadd.f32 1e-05, %v578
    %v580 = vpop.f32.mrb[0].mxu0
    %581 = vdwg.mxu0
    %v582 = vrsqrt.pop %v579
    %v583 = vmul.f32 %v511, %v582
    %v585 = vlaneseq
    %v586 = vshrl.u32 %v585, 7
    %v587 = vsub.s32 0, %v586
    %v588 = vrot.slane %v583, %v587
    %v590 = vmul.f32 %v509, %v588
    %v591 = vld [vmem:[%s6] sm:$0x1]
    %v593 = vlaneseq
    %v594 = vshrl.u32 %v593, 7
    %v595 = vsub.s32 0, %v594
    %v596 = vrot.slane %v591, %v595
    %v598 = vadd.f32 %v590, %v596
    %v599 = vmax.f32 %v598, 0.0
    %600 = vst [vmem:[#allocation7] sm:$0xff] %v599
    // Predicated region
    $region38: #{mlp_forward.1} parent=1 // pred_check
      _
    $region39: #{mlp_forward.1} parent=1 // pred_check_branch
      %602 = sbr.rel (0) target = $region41
    $region40: #{mlp_forward.1} parent=1 // pred_region
      %s604 = ssub.s32 128, 128
      %605 = vsyncadd [#allocation4], %s604
      %s607 = sshll.u32 [#allocation7], 4
      %s608 = int_to_ptr.vmem [resolvable:$true] %s607
      %610 = dma.vmem_to_hbm [thread:$0]  %s608, 128, %s7, [#allocation4]
    $region41: #{mlp_forward.1} parent=1 // pred_fallthru
      _
    // Predicated region
    $region42: #{mlp_forward.1} parent=1 // pred_check
      _
    $region43: #{mlp_forward.1} parent=1 // pred_check_branch
      %612 = sbr.rel (0) target = $region45
    $region44: #{mlp_forward.1} parent=1 // pred_region
      %613 = dma.done [#allocation4], 128
    $region45: #{mlp_forward.1} parent=1 // pred_fallthru
      _
    %614 = vsyncpa [#allocation3], 1
    %615 = vsyncpa [#allocation6], 1
    %616 = vsyncpa [#allocation4], 1

</llo_original>
